<compile_context>
chip_gen: v6e
topology: v6e:2x2x1
jax: 0.10.0
libtpu: 0.0.40
codegen_flags: <defaults>
</compile_context>

<pallas_src>
import functools
import math

import jax
import jax.numpy as jnp
from jax import lax
from jax.experimental import pallas as pl
from jax.experimental.pallas import tpu as pltpu


def _round_up(n, m):
    return (n + m - 1) // m * m


def _vmem_capacity_bytes():
    """Best-effort per-core VMEM capacity query; conservative fallback."""
    try:
        info = pltpu.get_tpu_info()
        for attr in ("vmem_capacity_bytes", "vmem_bytes", "vmem_size_bytes"):
            v = getattr(info, attr, None)
            if v:
                return int(v)
    except Exception:
        pass
    return 64 * 1024 * 1024  # v7x per-TensorCore (smallest current part)


def _make_sae_kernel(acc_in_output):
    """Grid = (batch tile i, hidden tile j); j is the decoder reduction axis.

    x_ref   : (TB, D)   input tile (same tile for every j)
    we_ref  : (D, TH)   encoder weight tile, pre-transposed in the wrapper
    be_ref  : (1, TH)   encoder bias tile (f32)
    wd_ref  : (TH, D)   decoder weight tile, pre-transposed in the wrapper
    bd_ref  : (1, D)    decoder bias (f32)
    xhat_ref: (TB, D)   reconstruction (resident across j)
    h_ref   : (TB, TH)  hidden activations tile (written every (i, j))
    xbar_ref: (TB, D)   compute-dtype scratch holding (x - b_dec)
    acc_ref : (TB, D)   f32 decoder accumulator (only when out dtype != f32;
                        otherwise we accumulate straight into xhat_ref)
    """

    def kernel(x_ref, we_ref, be_ref, wd_ref, bd_ref,
               xhat_ref, h_ref, xbar_ref, *scratch):
        acc_ref = xhat_ref if acc_in_output else scratch[0]
        j = pl.program_id(1)

        @pl.when(j == 0)
        def _init():
            # Hoisted once per batch tile: pre-encoder bias subtract + downcast.
            xbar_ref[...] = (x_ref[...].astype(jnp.float32)
                             - bd_ref[...]).astype(xbar_ref.dtype)
            # Seed the decoder accumulator with the decoder bias.
            acc_ref[...] = jnp.broadcast_to(
                bd_ref[...], acc_ref.shape).astype(acc_ref.dtype)

        x_bar = xbar_ref[...]

        # ---- encoder tile: h = relu(x_bar @ W_enc^T_tile + b_enc_tile) ----
        pre = lax.dot_general(
            x_bar, we_ref[...],
            dimension_numbers=(((1,), (0,)), ((), ())),
            preferred_element_type=jnp.float32,
        ) + be_ref[...]
        h = jnp.maximum(pre, 0.0)                     # (TB, TH) f32
        h_ref[...] = h.astype(h_ref.dtype)

        # ---- decoder: x_hat = b_dec + sum_j h_j @ W_dec_j^T ----------------
        acc_ref[...] += lax.dot_general(
            h.astype(wd_ref.dtype), wd_ref[...],
            dimension_numbers=(((1,), (0,)), ((), ())),
            preferred_element_type=jnp.float32,
        ).astype(acc_ref.dtype)

        if not acc_in_output:
            @pl.when(j == pl.num_programs(1) - 1)
            def _finalize():
                xhat_ref[...] = acc_ref[...].astype(xhat_ref.dtype)

    return kernel


def sparse_autoencoder_forward(x, w_enc, b_enc, w_dec, b_dec, *,
                               batch_tile=None, hidden_tile=None,
                               compute_dtype=jnp.bfloat16, h_dtype=None):
    """x: (B, D); w_enc: (H, D); b_enc: (H,); w_dec: (D, H); b_dec: (D,).

    compute_dtype : dtype for the MXU inputs (x / weights / h fed to the
        decoder). Default bfloat16 (accumulation stays f32). Pass None for an
        exact f32 path.
    h_dtype : dtype of the returned hidden activations. Default: compute_dtype
        (bf16 fast path) or x.dtype when compute_dtype is None.
    """
    B, D = x.shape
    H, _ = w_enc.shape
    out_dtype = x.dtype
    if h_dtype is None:
        h_dtype = compute_dtype if compute_dtype is not None else out_dtype

    if compute_dtype is not None:
        x = x.astype(compute_dtype)
        w_enc = w_enc.astype(compute_dtype)
        w_dec = w_dec.astype(compute_dtype)
    compute_dt = x.dtype

    # ---- generation-aware VMEM budget and tile defaults --------------------
    vmem_cap = _vmem_capacity_bytes()
    big_vmem = vmem_cap >= 96 * 1024 * 1024          # v5e / v6e (128 MiB)
    vmem_budget = min(vmem_cap - 8 * 1024 * 1024, int(vmem_cap * 0.84))
    if batch_tile is None:
        batch_tile = 1024 if big_vmem else 512
    if hidden_tile is None:
        hidden_tile = 1024 if big_vmem else 512

    # Lane/sublane-aligned padded feature dim and initial tile sizes.
    Dp = _round_up(D, 128)
    TB = min(batch_tile, _round_up(B, 16))
    TH = min(hidden_tile, _round_up(H, 128))

    # Keep >= 2 batch tiles when batch is large enough so the "parallel" axis
    # can feed both TensorCores on 2-TC chips (v7x).
    if B >= 512 and _round_up(B, TB) // TB < 2:
        TB = _round_up((B + 1) // 2, 16)

    # When the out dtype is f32, accumulate directly into the x_hat output
    # block (resident over j) and drop the separate f32 accumulator scratch.
    acc_in_output = jnp.dtype(out_dtype) == jnp.dtype(jnp.float32)

    in_b = jnp.dtype(compute_dt).itemsize
    xhat_b = jnp.dtype(out_dtype).itemsize
    h_b = jnp.dtype(h_dtype).itemsize

    def est_bytes(tb, th):
        e = 2 * tb * Dp * in_b          # x tile (double buffered)
        e += 2 * Dp * th * in_b         # W_enc^T tile
        e += 2 * th * Dp * in_b         # W_dec^T tile
        e += 2 * (th + Dp) * 4          # biases (f32)
        e += 2 * tb * Dp * xhat_b       # x_hat output tile
        e += 2 * tb * th * h_b          # h output tile
        e += tb * Dp * in_b             # x_bar scratch
        if not acc_in_output:
            e += tb * Dp * 4            # f32 accumulator scratch
        return e

    # Shrink tiles (not just the limit) until the footprint fits the budget.
    while est_bytes(TB, TH) > vmem_budget:
        if TH > 256:
            TH //= 2
        elif TB > 128:
            TB //= 2
        else:
            break  # D itself is huge; would need an input-dim tile as well.

    Bp = _round_up(B, TB)
    Hp = _round_up(H, TH)

    def pad2(a, r, c):
        pr, pc = r - a.shape[0], c - a.shape[1]
        return jnp.pad(a, ((0, pr), (0, pc))) if (pr or pc) else a

    # One-time HBM-side transposes (amortized over all batch tiles / j steps):
    x_p = pad2(x, Bp, Dp)
    we_p = pad2(w_enc.T, Dp, Hp)                                  # (Dp, Hp)
    wd_p = pad2(w_dec.T, Hp, Dp)                                  # (Hp, Dp)
    be_p = pad2(b_enc.reshape(1, H).astype(jnp.float32), 1, Hp)   # (1, Hp)
    bd_p = pad2(b_dec.reshape(1, D).astype(jnp.float32), 1, Dp)   # (1, Dp)

    grid = (Bp // TB, Hp // TH)

    scratch_shapes = [pltpu.VMEM((TB, Dp), compute_dt)]           # x_bar
    if not acc_in_output:
        scratch_shapes.append(pltpu.VMEM((TB, Dp), jnp.float32))  # decoder acc

    est = est_bytes(TB, TH)
    vmem_limit = int(min(max(est * 5 // 4, 32 * 1024 * 1024), vmem_budget))

    x_hat_p, h_p = pl.pallas_call(
        _make_sae_kernel(acc_in_output),
        out_shape=(
            jax.ShapeDtypeStruct((Bp, Dp), out_dtype),
            jax.ShapeDtypeStruct((Bp, Hp), h_dtype),
        ),
        grid_spec=pltpu.PrefetchScalarGridSpec(
            num_scalar_prefetch=0,
            grid=grid,
            in_specs=[
                pl.BlockSpec((TB, Dp), lambda i, j: (i, 0)),   # x
                pl.BlockSpec((Dp, TH), lambda i, j: (0, j)),   # W_enc^T
                pl.BlockSpec((1, TH), lambda i, j: (0, j)),    # b_enc
                pl.BlockSpec((TH, Dp), lambda i, j: (j, 0)),   # W_dec^T
                pl.BlockSpec((1, Dp), lambda i, j: (0, 0)),    # b_dec
            ],
            out_specs=[
                pl.BlockSpec((TB, Dp), lambda i, j: (i, 0)),   # x_hat (resident over j)
                pl.BlockSpec((TB, TH), lambda i, j: (i, j)),   # h
            ],
            scratch_shapes=scratch_shapes,
        ),
        compiler_params=pltpu.CompilerParams(
            dimension_semantics=("parallel", "arbitrary"),
            vmem_limit_bytes=vmem_limit,
        ),
    )(x_p, we_p, be_p, wd_p, bd_p)

    return x_hat_p[:B, :D], h_p[:B, :H]


def xavier_uniform(key, shape, gain):
    # PyTorch nn.init.xavier_uniform_ for a Linear weight (out_features, in_features).
    fan_out, fan_in = shape
    bound = gain * math.sqrt(6.0 / (fan_in + fan_out))
    return jax.random.uniform(key, shape, jnp.float32, minval=-bound, maxval=bound)


if __name__ == "__main__":
    # Small but lane-dense shapes (multiples of 128 features, 16 batch rows).
    batch = 16
    input_dim = 128
    hidden_dim = 256   # overcomplete: hidden_dim >= input_dim

    key = jax.random.PRNGKey(0)
    k_x, k_we, k_wd, k_be, k_bd = jax.random.split(key, 5)

    x = jax.random.normal(k_x, (batch, input_dim), jnp.float32)

    # Weight init mirrors the module's __init__; biases made non-zero here so
    # the pre-encoder-bias and decoder-bias paths are actually exercised
    # (the module itself initializes them to zero).
    w_enc = xavier_uniform(k_we, (hidden_dim, input_dim), gain=0.1)
    b_enc = 0.05 * jax.random.normal(k_be, (hidden_dim,), jnp.float32)
    w_dec = xavier_uniform(k_wd, (input_dim, hidden_dim), gain=0.1)
    b_dec = 0.05 * jax.random.normal(k_bd, (input_dim,), jnp.float32)

    # Pure-JAX reference for correctness.
    x_bar = x - b_dec
    h_ref = jnp.maximum(x_bar @ w_enc.T + b_enc, 0.0)
    x_hat_ref = h_ref @ w_dec.T + b_dec

    # --- exact f32 path ------------------------------------------------------
    fwd_f32 = jax.jit(functools.partial(sparse_autoencoder_forward,
                                        compute_dtype=None))
    x_hat32, h32 = fwd_f32(x, w_enc, b_enc, w_dec, b_dec)
    jax.block_until_ready((x_hat32, h32))
    assert x_hat32.shape == (batch, input_dim) and x_hat32.dtype == jnp.float32
    assert h32.shape == (batch, hidden_dim)
    assert jnp.allclose(h32, h_ref, atol=2e-5, rtol=2e-5)
    assert jnp.allclose(x_hat32, x_hat_ref, atol=2e-5, rtol=2e-5)

    # --- default bf16 MXU fast path (f32 accumulation) -----------------------
    fwd_bf16 = jax.jit(sparse_autoencoder_forward)
    x_hat16, h16 = fwd_bf16(x, w_enc, b_enc, w_dec, b_dec)
    jax.block_until_ready((x_hat16, h16))
    assert x_hat16.shape == (batch, input_dim) and x_hat16.dtype == jnp.float32
    assert h16.shape == (batch, hidden_dim)
    assert jnp.allclose(h16.astype(jnp.float32), h_ref, atol=2e-2, rtol=2e-2)
    assert jnp.allclose(x_hat16, x_hat_ref, atol=2e-2, rtol=2e-2)

    print("KERNEL_OK")
</pallas_src>

<mosaic_0001>
module attributes {stable_mosaic.version = 11 : i64} {
  func.func @kernel(%arg0: i32, %arg1: i32, %arg2: memref<16x128xf32, #tpu.memory_space<vmem>>, %arg3: memref<128x256xf32, #tpu.memory_space<vmem>>, %arg4: memref<1x256xf32, #tpu.memory_space<vmem>>, %arg5: memref<256x128xf32, #tpu.memory_space<vmem>>, %arg6: memref<1x128xf32, #tpu.memory_space<vmem>>, %arg7: memref<16x128xf32, #tpu.memory_space<vmem>>, %arg8: memref<16x256xf32, #tpu.memory_space<vmem>>, %arg9: memref<16x128xf32, #tpu.memory_space<vmem>>) attributes {dimension_semantics = [#tpu.dimension_semantics<parallel>, #tpu.dimension_semantics<arbitrary>], iteration_bounds = array<i64: 1, 1>, scalar_prefetch = 0 : i64, scratch_operands = 1 : i64, tpu.core_type = #tpu.core_type<tc>, window_params = [{transform_indices = @transform_0, window_bounds = array<i64: 16, 128>}, {transform_indices = @transform_1, window_bounds = array<i64: 128, 256>}, {transform_indices = @transform_2, window_bounds = array<i64: 1, 256>}, {transform_indices = @transform_3, window_bounds = array<i64: 256, 128>}, {pipeline_mode = #tpu.pipeline_mode<synchronous>, transform_indices = @transform_4, window_bounds = array<i64: 1, 128>}, {transform_indices = @transform_5, window_bounds = array<i64: 16, 128>}, {transform_indices = @transform_6, window_bounds = array<i64: 16, 256>}]} {
    %c0_i32 = arith.constant 0 : i32
    %0 = arith.cmpi eq, %arg1, %c0_i32 : i32
    %1 = arith.extui %0 : i1 to i32
    %c0_i32_0 = arith.constant 0 : i32
    %2 = arith.cmpi ne, %1, %c0_i32_0 : i32
    scf.if %2 {
      %c0_16 = arith.constant 0 : index
      %c0_17 = arith.constant 0 : index
      %17 = vector.load %arg2[%c0_16, %c0_17] : memref<16x128xf32, #tpu.memory_space<vmem>>, vector<16x128xf32>
      %c0_18 = arith.constant 0 : index
      %c0_19 = arith.constant 0 : index
      %18 = vector.load %arg6[%c0_18, %c0_19] : memref<1x128xf32, #tpu.memory_space<vmem>>, vector<1x128xf32>
      %19 = vector.broadcast %18 : vector<1x128xf32> to vector<16x128xf32>
      %20 = arith.subf %17, %19 : vector<16x128xf32>
      %c0_20 = arith.constant 0 : index
      %c0_21 = arith.constant 0 : index
      %21 = vector.load %arg9[%c0_20, %c0_21] : memref<16x128xf32, #tpu.memory_space<vmem>>, vector<16x128xf32>
      tpu.vector_store %arg9[%c0_20, %c0_21], %20 {strides = array<i32>} : memref<16x128xf32, #tpu.memory_space<vmem>>, vector<16x128xf32>,
      %c0_22 = arith.constant 0 : index
      %c0_23 = arith.constant 0 : index
      %22 = vector.load %arg6[%c0_22, %c0_23] : memref<1x128xf32, #tpu.memory_space<vmem>>, vector<1x128xf32>
      %23 = vector.shape_cast %22 : vector<1x128xf32> to vector<1x128xf32>
      %24 = vector.broadcast %23 : vector<1x128xf32> to vector<16x128xf32>
      %c0_24 = arith.constant 0 : index
      %c0_25 = arith.constant 0 : index
      %25 = vector.load %arg7[%c0_24, %c0_25] : memref<16x128xf32, #tpu.memory_space<vmem>>, vector<16x128xf32>
      tpu.vector_store %arg7[%c0_24, %c0_25], %24 {strides = array<i32>} : memref<16x128xf32, #tpu.memory_space<vmem>>, vector<16x128xf32>,
    } else {
    }
    %c0 = arith.constant 0 : index
    %c0_1 = arith.constant 0 : index
    %3 = vector.load %arg9[%c0, %c0_1] : memref<16x128xf32, #tpu.memory_space<vmem>>, vector<16x128xf32>
    %c0_2 = arith.constant 0 : index
    %c0_3 = arith.constant 0 : index
    %4 = vector.load %arg3[%c0_2, %c0_3] : memref<128x256xf32, #tpu.memory_space<vmem>>, vector<128x256xf32>
    %cst = arith.constant dense<0.000000e+00> : vector<16x256xf32>
    %5 = tpu.matmul %3, %4, %cst {dimension_numbers = #tpu.dot_dimension_numbers<[1], [0], [0], [1], [0, 0, 1, 1], [], []>} : vector<16x128xf32>, vector<128x256xf32>, vector<16x256xf32> -> vector<16x256xf32>
    %c0_4 = arith.constant 0 : index
    %c0_5 = arith.constant 0 : index
    %6 = vector.load %arg4[%c0_4, %c0_5] : memref<1x256xf32, #tpu.memory_space<vmem>>, vector<1x256xf32>
    %7 = vector.broadcast %6 : vector<1x256xf32> to vector<16x256xf32>
    %8 = arith.addf %5, %7 : vector<16x256xf32>
    %cst_6 = arith.constant 0.000000e+00 : f32
    %9 = vector.broadcast %cst_6 : f32 to vector<16x256xf32>
    %10 = arith.maximumf %8, %9 : vector<16x256xf32>
    %c0_7 = arith.constant 0 : index
    %c0_8 = arith.constant 0 : index
    %11 = vector.load %arg8[%c0_7, %c0_8] : memref<16x256xf32, #tpu.memory_space<vmem>>, vector<16x256xf32>
    tpu.vector_store %arg8[%c0_7, %c0_8], %10 {strides = array<i32>} : memref<16x256xf32, #tpu.memory_space<vmem>>, vector<16x256xf32>,
    %c0_9 = arith.constant 0 : index
    %c0_10 = arith.constant 0 : index
    %12 = vector.load %arg7[%c0_9, %c0_10] : memref<16x128xf32, #tpu.memory_space<vmem>>, vector<16x128xf32>
    %c0_11 = arith.constant 0 : index
    %c0_12 = arith.constant 0 : index
    %13 = vector.load %arg5[%c0_11, %c0_12] : memref<256x128xf32, #tpu.memory_space<vmem>>, vector<256x128xf32>
    %cst_13 = arith.constant dense<0.000000e+00> : vector<16x128xf32>
    %14 = tpu.matmul %10, %13, %cst_13 {dimension_numbers = #tpu.dot_dimension_numbers<[1], [0], [0], [1], [0, 0, 1, 1], [], []>} : vector<16x256xf32>, vector<256x128xf32>, vector<16x128xf32> -> vector<16x128xf32>
    %15 = arith.addf %12, %14 : vector<16x128xf32>
    %c0_14 = arith.constant 0 : index
    %c0_15 = arith.constant 0 : index
    %16 = vector.load %arg7[%c0_14, %c0_15] : memref<16x128xf32, #tpu.memory_space<vmem>>, vector<16x128xf32>
    tpu.vector_store %arg7[%c0_14, %c0_15], %15 {strides = array<i32>} : memref<16x128xf32, #tpu.memory_space<vmem>>, vector<16x128xf32>,
    return
  }
  func.func @transform_0(%arg0: i32, %arg1: i32) -> (i32, i32) {
    %c0_i32 = arith.constant 0 : i32
    %c0_i32_0 = arith.constant 0 : i32
    return %arg0, %c0_i32 : i32, i32
  }
  func.func @transform_1(%arg0: i32, %arg1: i32) -> (i32, i32) {
    %c0_i32 = arith.constant 0 : i32
    %c0_i32_0 = arith.constant 0 : i32
    return %c0_i32, %arg1 : i32, i32
  }
  func.func @transform_2(%arg0: i32, %arg1: i32) -> (i32, i32) {
    %c0_i32 = arith.constant 0 : i32
    %c0_i32_0 = arith.constant 0 : i32
    return %c0_i32, %arg1 : i32, i32
  }
  func.func @transform_3(%arg0: i32, %arg1: i32) -> (i32, i32) {
    %c0_i32 = arith.constant 0 : i32
    %c0_i32_0 = arith.constant 0 : i32
    return %arg1, %c0_i32 : i32, i32
  }
  func.func @transform_4(%arg0: i32, %arg1: i32) -> (i32, i32) {
    %c0_i32 = arith.constant 0 : i32
    %c0_i32_0 = arith.constant 0 : i32
    %c0_i32_1 = arith.constant 0 : i32
    return %c0_i32, %c0_i32_0 : i32, i32
  }
  func.func @transform_5(%arg0: i32, %arg1: i32) -> (i32, i32) {
    %c0_i32 = arith.constant 0 : i32
    %c0_i32_0 = arith.constant 0 : i32
    return %arg0, %c0_i32 : i32, i32
  }
  func.func @transform_6(%arg0: i32, %arg1: i32) -> (i32, i32) {
    %c0_i32 = arith.constant 0 : i32
    return %arg0, %arg1 : i32, i32
  }
}

</mosaic_0001>

<llo_original>
// kernel: sparse_autoencoder_forward.1
$region0: #{sparse_autoencoder_forward.1}
  #allocation0 [shape = 'u32[]', space=smem, size = 0x4, offset = 0x4, fixed_abs, tag = 'smem constant byte address 0x4 - core index']
  #allocation1 [shape = 'u32[144,128]{1,0:T(1,128)}', space=vmem, size = 0x12000, scoped, tag = 'internal scratch']
  #allocation2 [shape = 'f32[16,128]{1,0:T(8,128)}', space=vmem, size = 0x2000, scoped, tag = 'scratch operand']
  %s0 = inlined_call_operand.vmem [shape: f32[16,128], index: 0, kind: input, shape index: {}]
  %s1 = inlined_call_operand.vmem [shape: f32[128,256], index: 1, kind: input, shape index: {}]
  %s2 = inlined_call_operand.vmem [shape: f32[1,256], index: 2, kind: input, shape index: {}]
  %s3 = inlined_call_operand.vmem [shape: f32[256,128], index: 3, kind: input, shape index: {}]
  %s4 = inlined_call_operand.vmem [shape: f32[1,128], index: 4, kind: input, shape index: {}]
  %s5 = inlined_call_operand.hbm [shape: f32[16,128], index: 5, kind: output, shape index: {0}]
  %s6 = inlined_call_operand.hbm [shape: f32[16,256], index: 6, kind: output, shape index: {1}]
  %7 = xla_tuple %s5, %s6
  %s8 = sld [smem:[#allocation0]]
  $region42: #{sparse_autoencoder_forward.1} parent=0
    _
  %s10 = ssub.s32 1, %s8
  %s11 = scalar_select 0, %s10, %s8
  $region1: #{sparse_autoencoder_forward.1} parent=0
    #allocation3 [shape = 'u8[8192]{0}', space=vmem, size = 0x2000, scoped, tag = 'output window, operand 0, single buffered']
    #allocation4 [shape = 's32[1]{0}', space=sflag, size = 0x4, scoped, tag = 'scoped memory for sparse_autoencoder_forward.1']
    #allocation5 [shape = 'u8[16384]{0}', space=vmem, size = 0x4000, scoped, tag = 'output window, operand 1, single buffered']
    #allocation6 [shape = 's32[1]{0}', space=sflag, size = 0x4, scoped, tag = 'scoped memory for sparse_autoencoder_forward.1']
    %12 = vsyncpa [#allocation4], 0
    %13 = vsyncpa [#allocation6], 0
    // Predicated region
    $region2: #{sparse_autoencoder_forward.1} parent=1 // pred_check
      _
    $region3: #{sparse_autoencoder_forward.1} parent=1 // pred_check_branch
      %15 = sbr.rel (0) target = $region5
    $region4: #{sparse_autoencoder_forward.1} parent=1 // pred_region
      _
    $region5: #{sparse_autoencoder_forward.1} parent=1 // pred_fallthru
      _
    // Predicated region
    $region6: #{sparse_autoencoder_forward.1} parent=1 // pred_check
      _
    $region7: #{sparse_autoencoder_forward.1} parent=1 // pred_check_branch
      %17 = sbr.rel (0) target = $region9
    $region8: #{sparse_autoencoder_forward.1} parent=1 // pred_region
      _
    $region9: #{sparse_autoencoder_forward.1} parent=1 // pred_fallthru
      _
    // Predicated region
    $region10: #{sparse_autoencoder_forward.1} parent=1 // pred_check
      _
    $region11: #{sparse_autoencoder_forward.1} parent=1 // pred_check_branch
      %19 = sbr.rel (0) target = $region13
    $region12: #{sparse_autoencoder_forward.1} parent=1 // pred_region
      _
    $region13: #{sparse_autoencoder_forward.1} parent=1 // pred_fallthru
      _
    // Predicated region
    $region14: #{sparse_autoencoder_forward.1} parent=1 // pred_check
      _
    $region15: #{sparse_autoencoder_forward.1} parent=1 // pred_check_branch
      %21 = sbr.rel (0) target = $region17
    $region16: #{sparse_autoencoder_forward.1} parent=1 // pred_region
      _
    $region17: #{sparse_autoencoder_forward.1} parent=1 // pred_fallthru
      _
    // Predicated region
    $region18: #{sparse_autoencoder_forward.1} parent=1 // pred_check
      _
    $region19: #{sparse_autoencoder_forward.1} parent=1 // pred_check_branch
      %23 = sbr.rel (0) target = $region21
    $region20: #{sparse_autoencoder_forward.1} parent=1 // pred_region
      _
    $region21: #{sparse_autoencoder_forward.1} parent=1 // pred_fallthru
      _
    %p24 = scmp.eq.s32.totalorder 0, 0
    // Predicated region
    $region22: #{sparse_autoencoder_forward.1} parent=1 // pred_check
      %p25 = pneg %p24
    $region23: #{sparse_autoencoder_forward.1} parent=1 // pred_check_branch
      %27 = sbr.rel (%p25) target = $region25
    $region24: #{sparse_autoencoder_forward.1} parent=1 // pred_region
      %v28 = vld [vmem:[%s0] sm:$0xff]
      %v29 = vld [vmem:[%s0 + $0x8] sm:$0xff]
      %v30 = vld [vmem:[%s4] sm:$0x1]
      %v32 = vlaneseq
      %v33 = vshrl.u32 %v32, 7
      %v34 = vsub.s32 0, %v33
      %v35 = vrot.slane %v30, %v34
      %v37 = vsub.f32 %v28, %v35
      %v38 = vsub.f32 %v29, %v35
      %39 = vst [vmem:[#allocation2] sm:$0xff] %v37
      %40 = vst [vmem:[#allocation2 + $0x8] sm:$0xff] %v38
      %v41 = vld [vmem:[%s4] sm:$0x1]
      %v43 = vlaneseq
      %v44 = vshrl.u32 %v43, 7
      %v45 = vsub.s32 0, %v44
      %v46 = vrot.slane %v41, %v45
      %48 = vst [vmem:[#allocation3] sm:$0xff] %v46
      %49 = vst [vmem:[#allocation3 + $0x8] sm:$0xff] %v46
    $region25: #{sparse_autoencoder_forward.1} parent=1 // pred_fallthru
      _
    %v50 = vld [vmem:[#allocation2] sm:$0xff]
    %v51 = vld [vmem:[#allocation2 + $0x8] sm:$0xff]
    %v52 = vld [vmem:[%s1] sm:$0xff]
    %v53 = vld [vmem:[%s1 + $0x8] sm:$0xff]
    %v54 = vld [vmem:[%s1 + $0x10] sm:$0xff]
    %v55 = vld [vmem:[%s1 + $0x18] sm:$0xff]
    %v56 = vld [vmem:[%s1 + $0x20] sm:$0xff]
    %v57 = vld [vmem:[%s1 + $0x28] sm:$0xff]
    %v58 = vld [vmem:[%s1 + $0x30] sm:$0xff]
    %v59 = vld [vmem:[%s1 + $0x38] sm:$0xff]
    %v60 = vld [vmem:[%s1 + $0x40] sm:$0xff]
    %v61 = vld [vmem:[%s1 + $0x48] sm:$0xff]
    %v62 = vld [vmem:[%s1 + $0x50] sm:$0xff]
    %v63 = vld [vmem:[%s1 + $0x58] sm:$0xff]
    %v64 = vld [vmem:[%s1 + $0x60] sm:$0xff]
    %v65 = vld [vmem:[%s1 + $0x68] sm:$0xff]
    %v66 = vld [vmem:[%s1 + $0x70] sm:$0xff]
    %v67 = vld [vmem:[%s1 + $0x78] sm:$0xff]
    %v68 = vld [vmem:[%s1 + $0x80] sm:$0xff]
    %v69 = vld [vmem:[%s1 + $0x88] sm:$0xff]
    %v70 = vld [vmem:[%s1 + $0x90] sm:$0xff]
    %v71 = vld [vmem:[%s1 + $0x98] sm:$0xff]
    %v72 = vld [vmem:[%s1 + $0xa0] sm:$0xff]
    %v73 = vld [vmem:[%s1 + $0xa8] sm:$0xff]
    %v74 = vld [vmem:[%s1 + $0xb0] sm:$0xff]
    %v75 = vld [vmem:[%s1 + $0xb8] sm:$0xff]
    %v76 = vld [vmem:[%s1 + $0xc0] sm:$0xff]
    %v77 = vld [vmem:[%s1 + $0xc8] sm:$0xff]
    %v78 = vld [vmem:[%s1 + $0xd0] sm:$0xff]
    %v79 = vld [vmem:[%s1 + $0xd8] sm:$0xff]
    %v80 = vld [vmem:[%s1 + $0xe0] sm:$0xff]
    %v81 = vld [vmem:[%s1 + $0xe8] sm:$0xff]
    %v82 = vld [vmem:[%s1 + $0xf0] sm:$0xff]
    %v83 = vld [vmem:[%s1 + $0xf8] sm:$0xff]
    %v84 = vld [vmem:[%s2] sm:$0x3]
    %v86 = vlaneseq
    %v87 = vshrl.u32 %v86, 7
    %v88 = vsub.s32 0, %v87
    %v89 = vrot.slane %v84, %v88
    %v90 = vlaneseq
    %v91 = vshrl.u32 %v90, 7
    %v92 = vsub.s32 1, %v91
    %v93 = vrot.slane %v84, %v92
    %96 = vmatprep.subr.mxu0 %v83
    %97 = vmatpush1.msra.mxu0 %v82
    %98 = vmatprep.subr.mxu0 %v81
    %99 = vmatpush1.msra.mxu0 %v80
    %100 = vmatprep.subr.mxu0 %v79
    %101 = vmatpush1.msra.mxu0 %v78
    %102 = vmatprep.subr.mxu0 %v77
    %103 = vmatpush1.msra.mxu0 %v76
    %104 = vmatprep.subr.mxu0 %v75
    %105 = vmatpush1.msra.mxu0 %v74
    %106 = vmatprep.subr.mxu0 %v73
    %107 = vmatpush1.msra.mxu0 %v72
    %108 = vmatprep.subr.mxu0 %v71
    %109 = vmatpush1.msra.mxu0 %v70
    %110 = vmatprep.subr.mxu0 %v69
    %111 = vmatpush1.msra.mxu0 %v68
    %112 = vmatprep.subr.mxu0 %v67
    %113 = vmatpush1.msra.mxu0 %v66
    %114 = vmatprep.subr.mxu0 %v65
    %115 = vmatpush1.msra.mxu0 %v64
    %116 = vmatprep.subr.mxu0 %v63
    %117 = vmatpush1.msra.mxu0 %v62
    %118 = vmatprep.subr.mxu0 %v61
    %119 = vmatpush1.msra.mxu0 %v60
    %120 = vmatprep.subr.mxu0 %v59
    %121 = vmatpush1.msra.mxu0 %v58
    %122 = vmatprep.subr.mxu0 %v57
    %123 = vmatpush1.msra.mxu0 %v56
    %124 = vmatprep.subr.mxu0 %v55
    %125 = vmatpush1.msra.mxu0 %v54
    %126 = vmatprep.subr.mxu0 %v53
    %127 = vmatpush1.msra.mxu0 %v52
    %128 = vmatprep.subr.mxu0 0.0
    %129 = vmatpush2.msra.mxu0 0.0
    %130 = vmatprep.subr.mxu0 0.0
    %131 = vmatpush2.msra.mxu0 0.0
    %132 = vmatprep.subr.mxu0 0.0
    %133 = vmatpush2.msra.mxu0 0.0
    %134 = vmatprep.subr.mxu0 0.0
    %135 = vmatpush2.msra.mxu0 0.0
    %136 = vmatprep.subr.mxu0 0.0
    %137 = vmatpush2.msra.mxu0 0.0
    %138 = vmatprep.subr.mxu0 0.0
    %139 = vmatpush2.msra.mxu0 0.0
    %140 = vmatprep.subr.mxu0 0.0
    %141 = vmatpush2.msra.mxu0 0.0
    %142 = vmatprep.subr.mxu0 0.0
    %143 = vmatpush2.msra.mxu0 0.0
    %144 = vmatprep.subr.mxu0 0.0
    %145 = vmatpush2.msra.mxu0 0.0
    %146 = vmatprep.subr.mxu0 0.0
    %147 = vmatpush2.msra.mxu0 0.0
    %148 = vmatprep.subr.mxu0 0.0
    %149 = vmatpush2.msra.mxu0 0.0
    %150 = vmatprep.subr.mxu0 0.0
    %151 = vmatpush2.msra.mxu0 0.0
    %152 = vmatprep.subr.mxu0 0.0
    %153 = vmatpush2.msra.mxu0 0.0
    %154 = vmatprep.subr.mxu0 0.0
    %155 = vmatpush2.msra.mxu0 0.0
    %156 = vmatprep.subr.mxu0 0.0
    %157 = vmatpush2.msra.mxu0 0.0
    %158 = vmatprep.subr.mxu0 0.0
    %159 = vmatpush2.msra.mxu0 0.0
    %160 = vmatprep.mubr.f32.mxu0 0.0
    %161 = vmatmul.mubr.f32.gmra.mxu0 %v50
    %v162 = vpop.f32.mrf.mxu0
    %v163 = vadd.f32 %v89, %v162
    %v164 = vpop.f32.mrf.mxu0
    %v165 = vadd.f32 %v93, %v164
    %166 = vmatprep.mubr.f32.mxu0 0.0
    %167 = vmatmul.mubr.f32.gmra.mxu0 %v51
    %v168 = vpop.f32.mrf.mxu0
    %v169 = vadd.f32 %v89, %v168
    %v170 = vpop.f32.mrf.mxu0
    %v171 = vadd.f32 %v93, %v170
    %172 = vdwg.mxu0
    %v173 = vmax.f32 %v163, 0.0
    %v174 = vmax.f32 %v165, 0.0
    %v175 = vmax.f32 %v169, 0.0
    %v176 = vmax.f32 %v171, 0.0
    %177 = vst [vmem:[#allocation5] sm:$0xff] %v173
    %178 = vst [vmem:[#allocation5 + $0x8] sm:$0xff] %v174
    %179 = vst [vmem:[#allocation5 + $0x10] sm:$0xff] %v175
    %180 = vst [vmem:[#allocation5 + $0x18] sm:$0xff] %v176
    %v181 = vld [vmem:[#allocation3] sm:$0xff]
    %v182 = vld [vmem:[#allocation3 + $0x8] sm:$0xff]
    %v183 = vld [vmem:[%s3] sm:$0xff]
    %v184 = vld [vmem:[%s3 + $0x8] sm:$0xff]
    %v185 = vld [vmem:[%s3 + $0x10] sm:$0xff]
    %v186 = vld [vmem:[%s3 + $0x18] sm:$0xff]
    %v187 = vld [vmem:[%s3 + $0x20] sm:$0xff]
    %v188 = vld [vmem:[%s3 + $0x28] sm:$0xff]
    %v189 = vld [vmem:[%s3 + $0x30] sm:$0xff]
    %v190 = vld [vmem:[%s3 + $0x38] sm:$0xff]
    %v191 = vld [vmem:[%s3 + $0x40] sm:$0xff]
    %v192 = vld [vmem:[%s3 + $0x48] sm:$0xff]
    %v193 = vld [vmem:[%s3 + $0x50] sm:$0xff]
    %v194 = vld [vmem:[%s3 + $0x58] sm:$0xff]
    %v195 = vld [vmem:[%s3 + $0x60] sm:$0xff]
    %v196 = vld [vmem:[%s3 + $0x68] sm:$0xff]
    %v197 = vld [vmem:[%s3 + $0x70] sm:$0xff]
    %v198 = vld [vmem:[%s3 + $0x78] sm:$0xff]
    %v199 = vld [vmem:[%s3 + $0x80] sm:$0xff]
    %v200 = vld [vmem:[%s3 + $0x88] sm:$0xff]
    %v201 = vld [vmem:[%s3 + $0x90] sm:$0xff]
    %v202 = vld [vmem:[%s3 + $0x98] sm:$0xff]
    %v203 = vld [vmem:[%s3 + $0xa0] sm:$0xff]
    %v204 = vld [vmem:[%s3 + $0xa8] sm:$0xff]
    %v205 = vld [vmem:[%s3 + $0xb0] sm:$0xff]
    %v206 = vld [vmem:[%s3 + $0xb8] sm:$0xff]
    %v207 = vld [vmem:[%s3 + $0xc0] sm:$0xff]
    %v208 = vld [vmem:[%s3 + $0xc8] sm:$0xff]
    %v209 = vld [vmem:[%s3 + $0xd0] sm:$0xff]
    %v210 = vld [vmem:[%s3 + $0xd8] sm:$0xff]
    %v211 = vld [vmem:[%s3 + $0xe0] sm:$0xff]
    %v212 = vld [vmem:[%s3 + $0xe8] sm:$0xff]
    %v213 = vld [vmem:[%s3 + $0xf0] sm:$0xff]
    %v214 = vld [vmem:[%s3 + $0xf8] sm:$0xff]
    %215 = vmatprep.subr.mxu0 0.0
    %216 = vmatpush1.msra.mxu0 %v198
    %217 = vmatprep.subr.mxu0 0.0
    %218 = vmatpush1.msra.mxu0 %v197
    %219 = vmatprep.subr.mxu0 0.0
    %220 = vmatpush1.msra.mxu0 %v196
    %221 = vmatprep.subr.mxu0 0.0
    %222 = vmatpush1.msra.mxu0 %v195
    %223 = vmatprep.subr.mxu0 0.0
    %224 = vmatpush1.msra.mxu0 %v194
    %225 = vmatprep.subr.mxu0 0.0
    %226 = vmatpush1.msra.mxu0 %v193
    %227 = vmatprep.subr.mxu0 0.0
    %228 = vmatpush1.msra.mxu0 %v192
    %229 = vmatprep.subr.mxu0 0.0
    %230 = vmatpush1.msra.mxu0 %v191
    %231 = vmatprep.subr.mxu0 0.0
    %232 = vmatpush1.msra.mxu0 %v190
    %233 = vmatprep.subr.mxu0 0.0
    %234 = vmatpush1.msra.mxu0 %v189
    %235 = vmatprep.subr.mxu0 0.0
    %236 = vmatpush1.msra.mxu0 %v188
    %237 = vmatprep.subr.mxu0 0.0
    %238 = vmatpush1.msra.mxu0 %v187
    %239 = vmatprep.subr.mxu0 0.0
    %240 = vmatpush1.msra.mxu0 %v186
    %241 = vmatprep.subr.mxu0 0.0
    %242 = vmatpush1.msra.mxu0 %v185
    %243 = vmatprep.subr.mxu0 0.0
    %244 = vmatpush1.msra.mxu0 %v184
    %245 = vmatprep.subr.mxu0 0.0
    %246 = vmatpush1.msra.mxu0 %v183
    %247 = vmatprep.subr.mxu0 0.0
    %248 = vmatpush2.msra.mxu0 %v214
    %249 = vmatprep.subr.mxu0 0.0
    %250 = vmatpush2.msra.mxu0 %v213
    %251 = vmatprep.subr.mxu0 0.0
    %252 = vmatpush2.msra.mxu0 %v212
    %253 = vmatprep.subr.mxu0 0.0
    %254 = vmatpush2.msra.mxu0 %v211
    %255 = vmatprep.subr.mxu0 0.0
    %256 = vmatpush2.msra.mxu0 %v210
    %257 = vmatprep.subr.mxu0 0.0
    %258 = vmatpush2.msra.mxu0 %v209
    %259 = vmatprep.subr.mxu0 0.0
    %260 = vmatpush2.msra.mxu0 %v208
    %261 = vmatprep.subr.mxu0 0.0
    %262 = vmatpush2.msra.mxu0 %v207
    %263 = vmatprep.subr.mxu0 0.0
    %264 = vmatpush2.msra.mxu0 %v206
    %265 = vmatprep.subr.mxu0 0.0
    %266 = vmatpush2.msra.mxu0 %v205
    %267 = vmatprep.subr.mxu0 0.0
    %268 = vmatpush2.msra.mxu0 %v204
    %269 = vmatprep.subr.mxu0 0.0
    %270 = vmatpush2.msra.mxu0 %v203
    %271 = vmatprep.subr.mxu0 0.0
    %272 = vmatpush2.msra.mxu0 %v202
    %273 = vmatprep.subr.mxu0 0.0
    %274 = vmatpush2.msra.mxu0 %v201
    %275 = vmatprep.subr.mxu0 0.0
    %276 = vmatpush2.msra.mxu0 %v200
    %277 = vmatprep.subr.mxu0 0.0
    %278 = vmatpush2.msra.mxu0 %v199
    %279 = vmatprep.mubr.f32.mxu0 %v174
    %280 = vmatmul.mubr.f32.gmra.mxu0 %v173
    %v281 = vpop.f32.mrf.mxu0
    %v282 = vadd.f32 0.0, %v281
    %v283 = vpop.f32.mrf.mxu0
    %284 = vmatprep.mubr.f32.mxu0 %v176
    %285 = vmatmul.mubr.f32.gmra.mxu0 %v175
    %v286 = vpop.f32.mrf.mxu0
    %v287 = vadd.f32 0.0, %v286
    %v288 = vpop.f32.mrf.mxu0
    %289 = vdwg.mxu0
    %v290 = vadd.f32 %v181, %v282
    %v291 = vadd.f32 %v182, %v287
    %292 = vst [vmem:[#allocation3] sm:$0xff] %v290
    %293 = vst [vmem:[#allocation3 + $0x8] sm:$0xff] %v291
    // Predicated region
    $region26: #{sparse_autoencoder_forward.1} parent=1 // pred_check
      _
    $region27: #{sparse_autoencoder_forward.1} parent=1 // pred_check_branch
      %295 = sbr.rel (0) target = $region29
    $region28: #{sparse_autoencoder_forward.1} parent=1 // pred_region
      %s297 = ssub.s32 256, 256
      %298 = vsyncadd [#allocation4], %s297
      %s299 = sshll.u32 [#allocation3], 4
      %s300 = int_to_ptr.vmem [resolvable:$true] %s299
      %305 = dma.vmem_to_hbm [thread:$0]  %s300, 256, %s5, [#allocation4], 128, 128, 8
    $region29: #{sparse_autoencoder_forward.1} parent=1 // pred_fallthru
      _
    // Predicated region
    $region30: #{sparse_autoencoder_forward.1} parent=1 // pred_check
      _
    $region31: #{sparse_autoencoder_forward.1} parent=1 // pred_check_branch
      %307 = sbr.rel (0) target = $region33
    $region32: #{sparse_autoencoder_forward.1} parent=1 // pred_region
      %s309 = ssub.s32 512, 512
      %310 = vsyncadd [#allocation6], %s309
      %s311 = sshll.u32 [#allocation5], 4
      %s312 = int_to_ptr.vmem [resolvable:$true] %s311
      %317 = dma.vmem_to_hbm [thread:$0]  %s312, 512, %s6, [#allocation6], 256, 256, 16
    $region33: #{sparse_autoencoder_forward.1} parent=1 // pred_fallthru
      _
    // Predicated region
    $region34: #{sparse_autoencoder_forward.1} parent=1 // pred_check
      _
    $region35: #{sparse_autoencoder_forward.1} parent=1 // pred_check_branch
      %319 = sbr.rel (0) target = $region37
    $region36: #{sparse_autoencoder_forward.1} parent=1 // pred_region
      %320 = dma.done [#allocation4], 256
    $region37: #{sparse_autoencoder_forward.1} parent=1 // pred_fallthru
      _
    // Predicated region
    $region38: #{sparse_autoencoder_forward.1} parent=1 // pred_check
      _
    $region39: #{sparse_autoencoder_forward.1} parent=1 // pred_check_branch
      %322 = sbr.rel (0) target = $region41
    $region40: #{sparse_autoencoder_forward.1} parent=1 // pred_region
      %323 = dma.done [#allocation6], 512
    $region41: #{sparse_autoencoder_forward.1} parent=1 // pred_fallthru
      _
    %324 = vsyncpa [#allocation4], 1
    %325 = vsyncpa [#allocation6], 1

</llo_original>
